<compile_context>
chip_gen: v5e
topology: v5e:2x2
jax: 0.10.0
libtpu: 0.0.40
codegen_flags: <defaults>
</compile_context>

<pallas_src>
import jax
import jax.numpy as jnp
from jax.experimental import pallas as pl
from jax.experimental.pallas import tpu as pltpu

SIGMA = 1000.0  # module hard-codes self.sigma = 1000.0

_MAX_TS = 512    # rows of S per tile (multiple of 8)
_MAX_TN = 1024   # lanes per tile (multiple of 128)


def _round_up(x: int, m: int) -> int:
    return ((x + m - 1) // m) * m


def _rbf_kernel(x1_ref, x2_ref, o_ref, acc_ref):
    k = pl.program_id(1)                      # reduction (S) axis — last grid axis

    @pl.when(k == 0)
    def _init():
        acc_ref[...] = jnp.zeros_like(acc_ref)

    # Accumulate squared differences in f32 regardless of input dtype.
    d = x1_ref[...].astype(jnp.float32) - x2_ref[...].astype(jnp.float32)
    acc_ref[...] += jnp.sum(d * d, axis=0, keepdims=True)

    @pl.when(k == pl.num_programs(1) - 1)
    def _finalize():
        # Fold the /sigma and the negate into one constant multiply; exp on EUP.
        o_ref[...] = jnp.exp(acc_ref[...] * (-1.0 / SIGMA)).astype(o_ref.dtype)


def rbf(x1: jax.Array, x2: jax.Array) -> jax.Array:
    assert x1.shape == x2.shape, "x1 and x2 must have identical shapes"
    S, B, F = x1.shape
    BF = B * F

    # Lane-dense layout: [S, B*F]
    x1f = x1.reshape(S, BF)
    x2f = x2.reshape(S, BF)

    # Tile sizes (always satisfy the (8, 128) divisibility constraint).
    TS = min(_MAX_TS, _round_up(S, 8))
    TN = min(_MAX_TN, _round_up(BF, 128))
    S_pad = _round_up(S, TS)
    BF_pad = _round_up(BF, TN)

    if (S_pad, BF_pad) != (S, BF):
        # Zero padding on BOTH inputs → diff is 0 → contributes 0 to the sum.
        pad = ((0, S_pad - S), (0, BF_pad - BF))
        x1f = jnp.pad(x1f, pad)
        x2f = jnp.pad(x2f, pad)

    grid = (BF_pad // TN, S_pad // TS)        # (parallel N axis, reduction S axis last)

    out = pl.pallas_call(
        _rbf_kernel,
        out_shape=jax.ShapeDtypeStruct((1, BF_pad), x1.dtype),
        grid=grid,
        in_specs=[
            pl.BlockSpec((TS, TN), lambda n, k: (k, n)),
            pl.BlockSpec((TS, TN), lambda n, k: (k, n)),
        ],
        # Same output block across the S axis → accumulator-resident pattern.
        out_specs=pl.BlockSpec((1, TN), lambda n, k: (0, n)),
        scratch_shapes=[pltpu.VMEM((1, TN), jnp.float32)],
        compiler_params=pltpu.CompilerParams(
            dimension_semantics=("parallel", "arbitrary"),
            vmem_limit_bytes=32 * 1024 * 1024,
        ),
    )(x1f, x2f)

    return out[0, :BF].reshape(B, F)


def rbf_reference(x1, x2):
    d = x1.astype(jnp.float32) - x2.astype(jnp.float32)
    return jnp.exp(-jnp.sum(d * d, axis=0) / SIGMA).astype(x1.dtype)


if __name__ == "__main__":
    key = jax.random.PRNGKey(0)

    # Shape from the module docstring: [seq, batch, feature] with last two ~1.
    test_shapes = [(8, 2, 1), (300, 4, 3)]   # second case exercises padding + tiling

    for S, B, F in test_shapes:
        k1, k2 = jax.random.split(jax.random.fold_in(key, S), 2)
        x1 = jax.random.normal(k1, (S, B, F), dtype=jnp.float32)
        x2 = jax.random.normal(k2, (S, B, F), dtype=jnp.float32)

        out = rbf(x1, x2)
        jax.block_until_ready(out)

        ref = rbf_reference(x1, x2)
        assert out.shape == (B, F), (out.shape, (B, F))
        assert jnp.allclose(out, ref, rtol=1e-6, atol=1e-6), (out, ref)

    print("KERNEL_OK")
</pallas_src>

<mosaic_0001>
module attributes {stable_mosaic.version = 11 : i64} {
  func.func @_rbf_kernel(%arg0: i32, %arg1: i32, %arg2: memref<8x128xf32, #tpu.memory_space<vmem>>, %arg3: memref<8x128xf32, #tpu.memory_space<vmem>>, %arg4: memref<1x128xf32, #tpu.memory_space<vmem>>, %arg5: memref<1x128xf32, #tpu.memory_space<vmem>>) attributes {dimension_semantics = [#tpu.dimension_semantics<parallel>, #tpu.dimension_semantics<arbitrary>], iteration_bounds = array<i64: 1, 1>, scalar_prefetch = 0 : i64, scratch_operands = 1 : i64, tpu.core_type = #tpu.core_type<tc>, window_params = [{transform_indices = @transform_0, window_bounds = array<i64: 8, 128>}, {transform_indices = @transform_1, window_bounds = array<i64: 8, 128>}, {transform_indices = @transform_2, window_bounds = array<i64: 1, 128>}]} {
    %c0_i32 = arith.constant 0 : i32
    %0 = arith.cmpi eq, %arg1, %c0_i32 : i32
    %1 = arith.extui %0 : i1 to i32
    %c0_i32_0 = arith.constant 0 : i32
    %2 = arith.cmpi ne, %1, %c0_i32_0 : i32
    scf.if %2 {
      %cst_10 = arith.constant 0.000000e+00 : f32
      %15 = vector.broadcast %cst_10 : f32 to vector<1x128xf32>
      %c0_11 = arith.constant 0 : index
      %c0_12 = arith.constant 0 : index
      %16 = vector.load %arg5[%c0_11, %c0_12] : memref<1x128xf32, #tpu.memory_space<vmem>>, vector<1x128xf32>
      tpu.vector_store %arg5[%c0_11, %c0_12], %15 {strides = array<i32>} : memref<1x128xf32, #tpu.memory_space<vmem>>, vector<1x128xf32>,
    } else {
    }
    %c0 = arith.constant 0 : index
    %c0_1 = arith.constant 0 : index
    %3 = vector.load %arg2[%c0, %c0_1] : memref<8x128xf32, #tpu.memory_space<vmem>>, vector<8x128xf32>
    %c0_2 = arith.constant 0 : index
    %c0_3 = arith.constant 0 : index
    %4 = vector.load %arg3[%c0_2, %c0_3] : memref<8x128xf32, #tpu.memory_space<vmem>>, vector<8x128xf32>
    %5 = arith.subf %3, %4 : vector<8x128xf32>
    %c0_4 = arith.constant 0 : index
    %c0_5 = arith.constant 0 : index
    %6 = vector.load %arg5[%c0_4, %c0_5] : memref<1x128xf32, #tpu.memory_space<vmem>>, vector<1x128xf32>
    %7 = arith.mulf %5, %5 : vector<8x128xf32>
    %cst = arith.constant dense<0.000000e+00> : vector<128xf32>
    %8 = vector.multi_reduction <add>, %7, %cst [0] : vector<8x128xf32> to vector<128xf32>
    %9 = vector.shape_cast %8 : vector<128xf32> to vector<1x128xf32>
    %10 = arith.addf %6, %9 : vector<1x128xf32>
    %c0_6 = arith.constant 0 : index
    %c0_7 = arith.constant 0 : index
    %11 = vector.load %arg5[%c0_6, %c0_7] : memref<1x128xf32, #tpu.memory_space<vmem>>, vector<1x128xf32>
    tpu.vector_store %arg5[%c0_6, %c0_7], %10 {strides = array<i32>} : memref<1x128xf32, #tpu.memory_space<vmem>>, vector<1x128xf32>,
    %c0_i32_8 = arith.constant 0 : i32
    %12 = arith.cmpi eq, %arg1, %c0_i32_8 : i32
    %13 = arith.extui %12 : i1 to i32
    %c0_i32_9 = arith.constant 0 : i32
    %14 = arith.cmpi ne, %13, %c0_i32_9 : i32
    scf.if %14 {
      %c0_10 = arith.constant 0 : index
      %c0_11 = arith.constant 0 : index
      %15 = vector.load %arg5[%c0_10, %c0_11] : memref<1x128xf32, #tpu.memory_space<vmem>>, vector<1x128xf32>
      %cst_12 = arith.constant -1.000000e-03 : f32
      %16 = vector.broadcast %cst_12 : f32 to vector<1x128xf32>
      %17 = arith.mulf %15, %16 : vector<1x128xf32>
      %18 = math.exp %17 : vector<1x128xf32>
      %c0_13 = arith.constant 0 : index
      %c0_14 = arith.constant 0 : index
      %19 = vector.load %arg4[%c0_13, %c0_14] : memref<1x128xf32, #tpu.memory_space<vmem>>, vector<1x128xf32>
      tpu.vector_store %arg4[%c0_13, %c0_14], %18 {strides = array<i32>} : memref<1x128xf32, #tpu.memory_space<vmem>>, vector<1x128xf32>,
    } else {
    }
    return
  }
  func.func @transform_0(%arg0: i32, %arg1: i32) -> (i32, i32) {
    %c0_i32 = arith.constant 0 : i32
    return %arg1, %arg0 : i32, i32
  }
  func.func @transform_1(%arg0: i32, %arg1: i32) -> (i32, i32) {
    %c0_i32 = arith.constant 0 : i32
    return %arg1, %arg0 : i32, i32
  }
  func.func @transform_2(%arg0: i32, %arg1: i32) -> (i32, i32) {
    %c0_i32 = arith.constant 0 : i32
    %c0_i32_0 = arith.constant 0 : i32
    return %c0_i32, %arg0 : i32, i32
  }
}

</mosaic_0001>

<llo_original>
// kernel: tpu_custom_call.1
$region0: #{tpu_custom_call.1}
  #allocation0 [shape = 'u32[]', space=smem, size = 0x4, offset = 0x4, fixed_abs, tag = 'smem constant byte address 0x4 - core index']
  #allocation1 [shape = 'u32[72,128]{1,0:T(1,128)}', space=vmem, size = 0x9000, scoped, tag = 'internal scratch']
  #allocation2 [shape = 'f32[1,128]{1,0:T(1,128)}', space=vmem, size = 0x200, scoped, tag = 'scratch operand']
  %s0 = inlined_call_operand.hbm [shape: f32[8,128], index: 0, kind: input, shape index: {}]
  %s1 = inlined_call_operand.hbm [shape: f32[8,128], index: 1, kind: input, shape index: {}]
  %s2 = inlined_call_operand.hbm [shape: f32[1,128], index: 2, kind: output, shape index: {}]
  %s3 = sld [smem:[#allocation0]]
  $region34: #{tpu_custom_call.1} parent=0
    _
  %s5 = ssub.s32 1, %s3
  %s6 = scalar_select 0, %s5, %s3
  $region1: #{tpu_custom_call.1} parent=0
    #allocation3 [shape = 'u8[4096]{0}', space=vmem, size = 0x1000, scoped, tag = 'input window, operand 0, single buffered']
    #allocation4 [shape = 's32[1]{0}', space=sflag, size = 0x4, scoped, tag = 'scoped memory for tpu_custom_call.1']
    #allocation5 [shape = 's32[1]{0}', space=sflag, size = 0x4, scoped, tag = 'scoped memory for tpu_custom_call.1']
    #allocation6 [shape = 'u8[4096]{0}', space=vmem, size = 0x1000, scoped, tag = 'input window, operand 1, single buffered']
    #allocation7 [shape = 's32[1]{0}', space=sflag, size = 0x4, scoped, tag = 'scoped memory for tpu_custom_call.1']
    #allocation8 [shape = 'u8[512]{0}', space=vmem, size = 0x400, scoped, tag = 'output window, operand 0, single buffered']
    %7 = vsyncpa [#allocation4], 0
    %8 = vsyncpa [#allocation7], 0
    %9 = vsyncpa [#allocation5], 0
    // Predicated region
    $region2: #{tpu_custom_call.1} parent=1 // pred_check
      _
    $region3: #{tpu_custom_call.1} parent=1 // pred_check_branch
      %11 = sbr.rel (0) target = $region5
    $region4: #{tpu_custom_call.1} parent=1 // pred_region
      %13 = vsyncadd [#allocation4], 0
      %s15 = sshll.u32 %s0, 4
      %s16 = int_to_ptr.hbm [resolvable:$true] %s15
      %s17 = sshll.u32 [#allocation3], 4
      %s18 = int_to_ptr.vmem [resolvable:$true] %s17
      %20 = dma.hbm_to_vmem [thread:$0]  %s16, 128, %s18, [#allocation4]
    $region5: #{tpu_custom_call.1} parent=1 // pred_fallthru
      _
    // Predicated region
    $region6: #{tpu_custom_call.1} parent=1 // pred_check
      _
    $region7: #{tpu_custom_call.1} parent=1 // pred_check_branch
      %22 = sbr.rel (0) target = $region9
    $region8: #{tpu_custom_call.1} parent=1 // pred_region
      %24 = vsyncadd [#allocation7], 0
      %s26 = sshll.u32 %s1, 4
      %s27 = int_to_ptr.hbm [resolvable:$true] %s26
      %s28 = sshll.u32 [#allocation6], 4
      %s29 = int_to_ptr.vmem [resolvable:$true] %s28
      %31 = dma.hbm_to_vmem [thread:$0]  %s27, 128, %s29, [#allocation7]
    $region9: #{tpu_custom_call.1} parent=1 // pred_fallthru
      _
    // Predicated region
    $region10: #{tpu_custom_call.1} parent=1 // pred_check
      _
    $region11: #{tpu_custom_call.1} parent=1 // pred_check_branch
      %33 = sbr.rel (0) target = $region13
    $region12: #{tpu_custom_call.1} parent=1 // pred_region
      %35 = dma.done [#allocation4], 128
    $region13: #{tpu_custom_call.1} parent=1 // pred_fallthru
      _
    // Predicated region
    $region14: #{tpu_custom_call.1} parent=1 // pred_check
      _
    $region15: #{tpu_custom_call.1} parent=1 // pred_check_branch
      %37 = sbr.rel (0) target = $region17
    $region16: #{tpu_custom_call.1} parent=1 // pred_region
      %39 = dma.done [#allocation7], 128
    $region17: #{tpu_custom_call.1} parent=1 // pred_fallthru
      _
    %p40 = scmp.eq.s32.totalorder 0, 0
    // Predicated region
    $region18: #{tpu_custom_call.1} parent=1 // pred_check
      %p41 = pneg %p40
    $region19: #{tpu_custom_call.1} parent=1 // pred_check_branch
      %43 = sbr.rel (%p41) target = $region21
    $region20: #{tpu_custom_call.1} parent=1 // pred_region
      %44 = vst [vmem:[#allocation2] sm:$0x1] 0.0
    $region21: #{tpu_custom_call.1} parent=1 // pred_fallthru
      _
    %v45 = vld [vmem:[#allocation3] sm:$0xff]
    %v46 = vld [vmem:[#allocation6] sm:$0xff]
    %v47 = vsub.f32 %v45, %v46
    %v48 = vld [vmem:[#allocation2] sm:$0x1]
    %v49 = vmul.f32 %v47, %v47
    %v50 = vrot.slane %v49, 4
    %v51 = vadd.f32 %v49, %v50
    %v52 = vrot.slane %v51, 2
    %v53 = vadd.f32 %v51, %v52
    %v54 = vrot.slane %v53, 1
    %v55 = vadd.f32 %v53, %v54
    %v56 = vadd.f32 %v48, %v55
    %57 = vst [vmem:[#allocation2] sm:$0x1] %v56
    // Predicated region
    $region22: #{tpu_custom_call.1} parent=1 // pred_check
      %p58 = pneg %p40
    $region23: #{tpu_custom_call.1} parent=1 // pred_check_branch
      %60 = sbr.rel (%p58) target = $region25
    $region24: #{tpu_custom_call.1} parent=1 // pred_region
      %v61 = vld [vmem:[#allocation2] sm:$0x1]
      %v62 = vmul.f32 %v61, -0.001
      %v63 = vmul.f32 %v62, 1.442695
      %v64 = vpow.pop %v63
      %65 = vst [vmem:[#allocation8] sm:$0x1] %v64
    $region25: #{tpu_custom_call.1} parent=1 // pred_fallthru
      _
    // Predicated region
    $region26: #{tpu_custom_call.1} parent=1 // pred_check
      _
    $region27: #{tpu_custom_call.1} parent=1 // pred_check_branch
      %67 = sbr.rel (0) target = $region29
    $region28: #{tpu_custom_call.1} parent=1 // pred_region
      %69 = vsyncadd [#allocation5], 0
      %s71 = sshll.u32 [#allocation8], 4
      %s72 = int_to_ptr.vmem [resolvable:$true] %s71
      %s73 = sshll.u32 %s2, 4
      %s74 = int_to_ptr.hbm [resolvable:$true] %s73
      %76 = dma.vmem_to_hbm [thread:$0]  %s72, 16, %s74, [#allocation5]
    $region29: #{tpu_custom_call.1} parent=1 // pred_fallthru
      _
    // Predicated region
    $region30: #{tpu_custom_call.1} parent=1 // pred_check
      _
    $region31: #{tpu_custom_call.1} parent=1 // pred_check_branch
      %78 = sbr.rel (0) target = $region33
    $region32: #{tpu_custom_call.1} parent=1 // pred_region
      %80 = dma.done [#allocation5], 16
    $region33: #{tpu_custom_call.1} parent=1 // pred_fallthru
      _
    %81 = vsyncpa [#allocation4], 1
    %82 = vsyncpa [#allocation7], 1
    %83 = vsyncpa [#allocation5], 1

</llo_original>
